<compile_context>
chip_gen: v7x
topology: tpu7x:2x2x1
jax: 0.10.0
libtpu: 0.0.40
codegen_flags: <defaults>
</compile_context>

<pallas_src>
import functools

import jax
import jax.numpy as jnp
from jax.experimental import pallas as pl
from jax.experimental.pallas import tpu as pltpu

BN_EPS = 1e-5


def _round_up(x, m):
    return (x + m - 1) // m * m


def _vmem_limit_bytes():
    try:
        cap = pltpu.get_tpu_info().vmem_capacity_bytes
    except Exception:
        cap = 64 * 1024 * 1024
    # ~<=75% of physical VMEM, capped at 100 MiB: ~48 MiB on v7x (64 MiB
    # physical), ~96-100 MiB on v5e/v6e (128 MiB physical).
    return int(min(cap * 3 // 4, 100 * 1024 * 1024))


def _compiler_params():
    return pltpu.CompilerParams(
        dimension_semantics=("parallel", "parallel"),
        vmem_limit_bytes=_vmem_limit_bytes())


def _row_tile(lout, cout_pad):
    """Row tile: multiple of 8, f32 accumulator tile capped near 128 KiB."""
    rt_cap = max(8, ((128 * 1024) // (4 * cout_pad)) // 8 * 8)
    rt = min(rt_cap, 256, _round_up(lout, 8))
    return rt, -(-lout // rt)


# ----------------------------------------------------------------------------
# Fused BasicBlock kernel: one row tile of the whole block per grid step.
# ----------------------------------------------------------------------------
def _basic_block_kernel(p_ref, w1_ref, wsc_ref, w2_ref, ss1_ref, ss2_ref,
                        sssc_ref, out_ref, *, ksize, rt, pad, lout):
    """refs:
      p_ref   (1, 1, rt+K-1, K*Cin)   bf16  conv1 im2col patches (+ conv2 halo)
      w1_ref  (K*Cin, Cout_pad)       bf16  conv1 weight, taps folded into rows
      wsc_ref (K*Cin, Cout_pad)       bf16  shortcut weight (centre-tap rows)
      w2_ref  (K*Cout_pad, Cout_pad)  bf16  conv2 weight, taps folded into rows
      ss*_ref (2, Cout_pad)           f32   folded BN (scale, shift)
      out_ref (1, rt, Cout_pad)
    """
    r0 = pl.program_id(1) * rt            # first conv2-output row of this tile
    rows1 = rt + ksize - 1

    patch = p_ref[0, 0]                                    # (rows1, K*Cin)

    # ---- conv1 + BN1 + ReLU over rt + K - 1 rows (includes conv2's halo) ---
    acc1 = jnp.dot(patch, w1_ref[...], preferred_element_type=jnp.float32)
    y1 = jnp.maximum(acc1 * ss1_ref[0:1, :] + ss1_ref[1:2, :], 0.0)
    # Rows outside [0, lout) are conv2's zero padding -> force exact zeros.
    m = r0 - pad + jax.lax.broadcasted_iota(jnp.int32, y1.shape, 0)
    y1 = jnp.where((m >= 0) & (m < lout), y1, 0.0)

    # ---- conv2 + BN2: K taps folded into one contraction via lane concat ---
    patch2 = jnp.concatenate([y1[k:k + rt, :] for k in range(ksize)], axis=-1)
    acc2 = jnp.dot(patch2.astype(jnp.bfloat16), w2_ref[...],
                   preferred_element_type=jnp.float32)
    y2 = acc2 * ss2_ref[0:1, :] + ss2_ref[1:2, :]

    # ---- shortcut (+BN_sc or identity): centre-tap lanes of the same patch --
    accs = jnp.dot(patch, wsc_ref[...], preferred_element_type=jnp.float32)
    ysc = accs[pad:pad + rt, :] * sssc_ref[0:1, :] + sssc_ref[1:2, :]

    out_ref[0] = jnp.maximum(y2 + ysc, 0.0).astype(out_ref.dtype)


# ----------------------------------------------------------------------------
# One-time parameter preparation (hoisted out of the forward path).
# ----------------------------------------------------------------------------
def _fold_bn(gamma, beta, mean, var, cout_pad):
    """BN (eval mode) -> per-channel (scale, shift); padded channels are 0."""
    scale = gamma / jnp.sqrt(var + BN_EPS)
    shift = beta - mean * scale
    ss = jnp.stack([scale, shift], axis=0).astype(jnp.float32)
    return jnp.pad(ss, ((0, 0), (0, cout_pad - gamma.shape[0])))


def prepare_block_params(params, *, in_channels, kernel_size, stride):
    """Transpose / pad / bf16-cast weights and fold BN, once at load time."""
    k, cin = kernel_size, in_channels
    pad = (k - 1) // 2
    out_ch = params["w1"].shape[0]
    cout_pad = _round_up(out_ch, 128)

    # conv1 (Cout, Cin, K) -> (K*Cin, Cout_pad), row index = k*Cin + ci.
    w1 = jnp.transpose(params["w1"], (2, 1, 0)).reshape(k * cin, out_ch)
    w1 = jnp.pad(w1, ((0, 0), (0, cout_pad - out_ch))).astype(jnp.bfloat16)

    # conv2 (Cout, Cout, K) -> (K*Cout_pad, Cout_pad).
    w2 = jnp.transpose(params["w2"], (2, 1, 0))
    w2 = jnp.pad(w2, ((0, 0), (0, cout_pad - out_ch), (0, cout_pad - out_ch)))
    w2 = w2.reshape(k * cout_pad, cout_pad).astype(jnp.bfloat16)

    # Shortcut: 1x1 projection conv + BN, or identity; both expressed as a
    # (K*Cin, Cout_pad) matrix whose only nonzero rows are the centre tap, so
    # the kernel reuses the conv1 patch tile already in VMEM.
    projection = (stride != 1) or (in_channels != out_ch)
    if projection:
        wsc_tap = jnp.transpose(params["w_sc"][:, :, 0]).astype(jnp.float32)
        sssc = _fold_bn(params["bn_sc_gamma"], params["bn_sc_beta"],
                        params["bn_sc_mean"], params["bn_sc_var"], cout_pad)
    else:
        wsc_tap = jnp.eye(cin, out_ch, dtype=jnp.float32)
        sssc = jnp.pad(
            jnp.stack([jnp.ones((out_ch,), jnp.float32),
                       jnp.zeros((out_ch,), jnp.float32)], axis=0),
            ((0, 0), (0, cout_pad - out_ch)))
    wsc = jnp.zeros((k * cin, cout_pad), jnp.float32)
    wsc = wsc.at[pad * cin:(pad + 1) * cin, :out_ch].set(wsc_tap)
    wsc = wsc.astype(jnp.bfloat16)

    return {
        "w1": w1, "w2": w2, "wsc": wsc,
        "ss1": _fold_bn(params["bn1_gamma"], params["bn1_beta"],
                        params["bn1_mean"], params["bn1_var"], cout_pad),
        "ss2": _fold_bn(params["bn2_gamma"], params["bn2_beta"],
                        params["bn2_mean"], params["bn2_var"], cout_pad),
        "sssc": sssc,
    }


# ----------------------------------------------------------------------------
# Wrapper: lane-dense im2col patches + the fused pallas_call.
# ----------------------------------------------------------------------------
def _build_patches(x_nlc, *, ksize, stride, pad, rt, n_rt):
    """(N, L, Cin) bf16 -> (N, n_rt, rt+K-1, K*Cin) lane-dense conv1 patches.

    patch[n, rr, t, k*Cin + c] = x_padded[n, (rr*rt - pad + t)*stride + k, c]
    with x_padded = conv1's zero-padded input; out-of-range rows are zero and
    additionally masked in-kernel.
    """
    n, L, cin = x_nlc.shape
    lout_pad = rt * n_rt
    rows1 = rt + ksize - 1
    off = pad * stride                      # so out1 row -pad maps to index 0
    m_rows = lout_pad + ksize - 1
    total = max((m_rows - 1) * stride + ksize, off + pad + L)
    xp = jnp.pad(x_nlc, ((0, 0), (off + pad, total - (off + pad) - L), (0, 0)))
    taps = [xp[:, k::stride, :][:, :m_rows, :] for k in range(ksize)]
    xks = jnp.stack(taps, axis=2).reshape(n, m_rows, ksize * cin)
    idx = jnp.arange(n_rt)[:, None] * rt + jnp.arange(rows1)[None, :]
    return jnp.take(xks, idx, axis=1)       # (N, n_rt, rows1, K*Cin)


@functools.partial(jax.jit,
                   static_argnames=("out_channels", "kernel_size", "stride"))
def basic_block_forward(x_ncl, prep, *, out_channels, kernel_size, stride):
    """x_ncl: (N, Cin, L) f32 -> (N, Cout, Lout) f32 (PyTorch NCL layout)."""
    n, cin, L = x_ncl.shape
    k = kernel_size
    pad = (k - 1) // 2
    lout = (L + 2 * pad - k) // stride + 1
    cout_pad = _round_up(out_channels, 128)
    rt, n_rt = _row_tile(lout, cout_pad)
    rows1 = rt + k - 1
    kcx = k * cin

    x_nlc = jnp.transpose(x_ncl, (0, 2, 1)).astype(jnp.bfloat16)
    patches = _build_patches(x_nlc, ksize=k, stride=stride, pad=pad,
                             rt=rt, n_rt=n_rt)

    kernel = functools.partial(_basic_block_kernel, ksize=k, rt=rt, pad=pad,
                               lout=lout)
    const = lambda nn, rr: (0, 0)

    out = pl.pallas_call(
        kernel,
        out_shape=jax.ShapeDtypeStruct((n, rt * n_rt, cout_pad), jnp.float32),
        grid_spec=pltpu.PrefetchScalarGridSpec(
            num_scalar_prefetch=0,
            grid=(n, n_rt),
            in_specs=[
                pl.BlockSpec((1, 1, rows1, kcx),
                             lambda nn, rr: (nn, rr, 0, 0)),
                pl.BlockSpec((kcx, cout_pad), const),          # w1
                pl.BlockSpec((kcx, cout_pad), const),          # wsc
                pl.BlockSpec((k * cout_pad, cout_pad), const),  # w2
                pl.BlockSpec((2, cout_pad), const),            # ss1
                pl.BlockSpec((2, cout_pad), const),            # ss2
                pl.BlockSpec((2, cout_pad), const),            # sssc
            ],
            out_specs=pl.BlockSpec((1, rt, cout_pad),
                                   lambda nn, rr: (nn, rr, 0)),
        ),
        compiler_params=_compiler_params(),
    )(patches, prep["w1"], prep["wsc"], prep["w2"],
      prep["ss1"], prep["ss2"], prep["sssc"])

    return jnp.transpose(out[:, :lout, :out_channels], (0, 2, 1))


# ----------------------------------------------------------------------------
# Pure-JAX reference (f32) for correctness checking.
# ----------------------------------------------------------------------------
def _conv1d_ref(x_ncl, w, stride, pad):
    return jax.lax.conv_general_dilated(
        x_ncl, w, window_strides=(stride,), padding=[(pad, pad)],
        dimension_numbers=("NCH", "OIH", "NCH"))


def _bn_ref(x_ncl, gamma, beta, mean, var):
    scale = (gamma / jnp.sqrt(var + BN_EPS))[None, :, None]
    shift = (beta - mean * gamma / jnp.sqrt(var + BN_EPS))[None, :, None]
    return x_ncl * scale + shift


def basic_block_ref(x_ncl, params, *, kernel_size, stride):
    in_ch = x_ncl.shape[1]
    out_ch = params["w1"].shape[0]
    pad = (kernel_size - 1) // 2
    out = jax.nn.relu(_bn_ref(_conv1d_ref(x_ncl, params["w1"], stride, pad),
                              params["bn1_gamma"], params["bn1_beta"],
                              params["bn1_mean"], params["bn1_var"]))
    out = _bn_ref(_conv1d_ref(out, params["w2"], 1, pad),
                  params["bn2_gamma"], params["bn2_beta"],
                  params["bn2_mean"], params["bn2_var"])
    if stride != 1 or in_ch != out_ch:
        sc = _bn_ref(_conv1d_ref(x_ncl, params["w_sc"], stride, 0),
                     params["bn_sc_gamma"], params["bn_sc_beta"],
                     params["bn_sc_mean"], params["bn_sc_var"])
    else:
        sc = x_ncl
    return jax.nn.relu(out + sc)


# ----------------------------------------------------------------------------
# main
# ----------------------------------------------------------------------------
def _make_params(key, cin, cout, k, with_shortcut):
    ks = jax.random.split(key, 10)
    p = {
        "w1": 0.1 * jax.random.normal(ks[0], (cout, cin, k), jnp.float32),
        "bn1_gamma": 1.0 + 0.1 * jax.random.normal(ks[1], (cout,), jnp.float32),
        "bn1_beta": 0.1 * jax.random.normal(ks[2], (cout,), jnp.float32),
        "bn1_mean": 0.05 * jax.random.normal(ks[3], (cout,), jnp.float32),
        "bn1_var": 1.0 + 0.1 * jax.random.uniform(ks[3], (cout,), jnp.float32),
        "w2": 0.1 * jax.random.normal(ks[4], (cout, cout, k), jnp.float32),
        "bn2_gamma": 1.0 + 0.1 * jax.random.normal(ks[5], (cout,), jnp.float32),
        "bn2_beta": 0.1 * jax.random.normal(ks[6], (cout,), jnp.float32),
        "bn2_mean": 0.05 * jax.random.normal(ks[6], (cout,), jnp.float32),
        "bn2_var": 1.0 + 0.1 * jax.random.uniform(ks[5], (cout,), jnp.float32),
    }
    if with_shortcut:
        p.update({
            "w_sc": 0.1 * jax.random.normal(ks[7], (cout, cin, 1), jnp.float32),
            "bn_sc_gamma":
                1.0 + 0.1 * jax.random.normal(ks[8], (cout,), jnp.float32),
            "bn_sc_beta": 0.1 * jax.random.normal(ks[9], (cout,), jnp.float32),
            "bn_sc_mean": 0.05 * jax.random.normal(ks[8], (cout,), jnp.float32),
            "bn_sc_var":
                1.0 + 0.1 * jax.random.uniform(ks[9], (cout,), jnp.float32),
        })
    return p


def _run_case(key, *, n, cin, cout, L, k, stride, tol):
    kp, kx = jax.random.split(key)
    with_sc = (stride != 1) or (cin != cout)
    params = _make_params(kp, cin, cout, k, with_sc)
    x = jax.random.normal(kx, (n, cin, L), jnp.float32)   # NCL, like PyTorch

    prep = prepare_block_params(params, in_channels=cin, kernel_size=k,
                                stride=stride)
    out = basic_block_forward(x, prep, out_channels=cout, kernel_size=k,
                              stride=stride)
    out = jax.block_until_ready(out)

    ref = basic_block_ref(x, params, kernel_size=k, stride=stride)
    lout = (L + 2 * ((k - 1) // 2) - k) // stride + 1
    assert out.shape == ref.shape == (n, cout, lout), (out.shape, ref.shape)
    err = float(jnp.max(jnp.abs(out - ref)))
    # bf16 activations / weights on the MXU loosen the tolerance vs f32 ref.
    assert err < tol, f"max abs err {err}"
    return err


if __name__ == "__main__":
    key = jax.random.PRNGKey(0)
    k1, k2 = jax.random.split(key)

    # Projection shortcut: stride 2, channel change (CIN=4 -> COUT=8, L=16).
    _run_case(k1, n=2, cin=4, cout=8, L=16, k=3, stride=2, tol=3e-2)
    # Identity shortcut: stride 1, same channels (8 -> 8, L=16).
    _run_case(k2, n=2, cin=8, cout=8, L=16, k=3, stride=1, tol=3e-2)

    print("KERNEL_OK")
</pallas_src>

<mosaic_0001>
module attributes {stable_mosaic.version = 11 : i64} {
  func.func @_basic_block_kernel(%arg0: i32, %arg1: i32, %arg2: memref<1x1x10x12xbf16, #tpu.memory_space<vmem>>, %arg3: memref<12x128xbf16, #tpu.memory_space<vmem>>, %arg4: memref<12x128xbf16, #tpu.memory_space<vmem>>, %arg5: memref<384x128xbf16, #tpu.memory_space<vmem>>, %arg6: memref<2x128xf32, #tpu.memory_space<vmem>>, %arg7: memref<2x128xf32, #tpu.memory_space<vmem>>, %arg8: memref<2x128xf32, #tpu.memory_space<vmem>>, %arg9: memref<1x8x128xf32, #tpu.memory_space<vmem>>) attributes {dimension_semantics = [#tpu.dimension_semantics<parallel>, #tpu.dimension_semantics<parallel>], iteration_bounds = array<i64: 2, 1>, scalar_prefetch = 0 : i64, scratch_operands = 0 : i64, tpu.core_type = #tpu.core_type<tc>, window_params = [{transform_indices = @transform_0, window_bounds = array<i64: 1, 1, 10, 12>}, {pipeline_mode = #tpu.pipeline_mode<synchronous>, transform_indices = @transform_1, window_bounds = array<i64: 12, 128>}, {pipeline_mode = #tpu.pipeline_mode<synchronous>, transform_indices = @transform_2, window_bounds = array<i64: 12, 128>}, {pipeline_mode = #tpu.pipeline_mode<synchronous>, transform_indices = @transform_3, window_bounds = array<i64: 384, 128>}, {pipeline_mode = #tpu.pipeline_mode<synchronous>, transform_indices = @transform_4, window_bounds = array<i64: 2, 128>}, {pipeline_mode = #tpu.pipeline_mode<synchronous>, transform_indices = @transform_5, window_bounds = array<i64: 2, 128>}, {pipeline_mode = #tpu.pipeline_mode<synchronous>, transform_indices = @transform_6, window_bounds = array<i64: 2, 128>}, {transform_indices = @transform_7, window_bounds = array<i64: 1, 8, 128>}]} {
    %c8_i32 = arith.constant 8 : i32
    %0 = arith.muli %arg1, %c8_i32 : i32
    %c0 = arith.constant 0 : index
    %c0_0 = arith.constant 0 : index
    %c0_1 = arith.constant 0 : index
    %c0_2 = arith.constant 0 : index
    %1 = vector.load %arg2[%c0, %c0_0, %c0_1, %c0_2] : memref<1x1x10x12xbf16, #tpu.memory_space<vmem>>, vector<1x1x10x12xbf16>
    %2 = vector.shape_cast %1 : vector<1x1x10x12xbf16> to vector<10x12xbf16>
    %c0_3 = arith.constant 0 : index
    %c0_4 = arith.constant 0 : index
    %3 = vector.load %arg3[%c0_3, %c0_4] : memref<12x128xbf16, #tpu.memory_space<vmem>>, vector<12x128xbf16>
    %cst = arith.constant dense<0.000000e+00> : vector<10x128xf32>
    %4 = tpu.matmul %2, %3, %cst {dimension_numbers = #tpu.dot_dimension_numbers<[1], [0], [0], [1], [0, 0, 1, 1], [], []>} : vector<10x12xbf16>, vector<12x128xbf16>, vector<10x128xf32> -> vector<10x128xf32>
    %c0_5 = arith.constant 0 : index
    %c0_6 = arith.constant 0 : index
    %5 = vector.load %arg6[%c0_5, %c0_6] : memref<2x128xf32, #tpu.memory_space<vmem>>, vector<1x128xf32>
    %6 = vector.broadcast %5 : vector<1x128xf32> to vector<10x128xf32>
    %7 = arith.mulf %4, %6 : vector<10x128xf32>
    %c1 = arith.constant 1 : index
    %c0_7 = arith.constant 0 : index
    %8 = vector.load %arg6[%c1, %c0_7] : memref<2x128xf32, #tpu.memory_space<vmem>>, vector<1x128xf32>
    %9 = vector.broadcast %8 : vector<1x128xf32> to vector<10x128xf32>
    %10 = arith.addf %7, %9 : vector<10x128xf32>
    %cst_8 = arith.constant 0.000000e+00 : f32
    %11 = vector.broadcast %cst_8 : f32 to vector<10x128xf32>
    %12 = arith.maximumf %10, %11 : vector<10x128xf32>
    %c1_i32 = arith.constant 1 : i32
    %13 = arith.subi %0, %c1_i32 : i32
    %14 = tpu.iota {dimensions = array<i32: 0>} : vector<10x128xi32>
    %15 = vector.broadcast %13 : i32 to vector<10x128xi32>
    %16 = arith.addi %15, %14 : vector<10x128xi32>
    %c0_i32 = arith.constant 0 : i32
    %17 = vector.broadcast %c0_i32 : i32 to vector<10x128xi32>
    %18 = arith.cmpi sge, %16, %17 : vector<10x128xi32>
    %c8_i32_9 = arith.constant 8 : i32
    %19 = vector.broadcast %c8_i32_9 : i32 to vector<10x128xi32>
    %20 = arith.cmpi slt, %16, %19 : vector<10x128xi32>
    %21 = arith.andi %18, %20 : vector<10x128xi1>
    %cst_10 = arith.constant 0.000000e+00 : f32
    %22 = vector.broadcast %cst_10 : f32 to vector<10x128xf32>
    %23 = arith.select %21, %12, %22 : vector<10x128xi1>, vector<10x128xf32>
    %24 = vector.extract_strided_slice %23 {offsets = [0, 0], sizes = [8, 128], strides = [1, 1]} : vector<10x128xf32> to vector<8x128xf32>
    %25 = vector.extract_strided_slice %23 {offsets = [1, 0], sizes = [8, 128], strides = [1, 1]} : vector<10x128xf32> to vector<8x128xf32>
    %26 = vector.extract_strided_slice %23 {offsets = [2, 0], sizes = [8, 128], strides = [1, 1]} : vector<10x128xf32> to vector<8x128xf32>
    %27 = tpu.concatenate %24, %25, %26 in 1 : vector<8x128xf32>, vector<8x128xf32>, vector<8x128xf32> -> vector<8x384xf32>
    %28 = arith.truncf %27 : vector<8x384xf32> to vector<8x384xbf16>
    %c0_11 = arith.constant 0 : index
    %c0_12 = arith.constant 0 : index
    %29 = vector.load %arg5[%c0_11, %c0_12] : memref<384x128xbf16, #tpu.memory_space<vmem>>, vector<384x128xbf16>
    %cst_13 = arith.constant dense<0.000000e+00> : vector<8x128xf32>
    %30 = tpu.matmul %28, %29, %cst_13 {dimension_numbers = #tpu.dot_dimension_numbers<[1], [0], [0], [1], [0, 0, 1, 1], [], []>} : vector<8x384xbf16>, vector<384x128xbf16>, vector<8x128xf32> -> vector<8x128xf32>
    %c0_14 = arith.constant 0 : index
    %c0_15 = arith.constant 0 : index
    %31 = vector.load %arg7[%c0_14, %c0_15] : memref<2x128xf32, #tpu.memory_space<vmem>>, vector<1x128xf32>
    %32 = vector.broadcast %31 : vector<1x128xf32> to vector<8x128xf32>
    %33 = arith.mulf %30, %32 : vector<8x128xf32>
    %c1_16 = arith.constant 1 : index
    %c0_17 = arith.constant 0 : index
    %34 = vector.load %arg7[%c1_16, %c0_17] : memref<2x128xf32, #tpu.memory_space<vmem>>, vector<1x128xf32>
    %35 = vector.broadcast %34 : vector<1x128xf32> to vector<8x128xf32>
    %36 = arith.addf %33, %35 : vector<8x128xf32>
    %c0_18 = arith.constant 0 : index
    %c0_19 = arith.constant 0 : index
    %37 = vector.load %arg4[%c0_18, %c0_19] : memref<12x128xbf16, #tpu.memory_space<vmem>>, vector<12x128xbf16>
    %cst_20 = arith.constant dense<0.000000e+00> : vector<10x128xf32>
    %38 = tpu.matmul %2, %37, %cst_20 {dimension_numbers = #tpu.dot_dimension_numbers<[1], [0], [0], [1], [0, 0, 1, 1], [], []>} : vector<10x12xbf16>, vector<12x128xbf16>, vector<10x128xf32> -> vector<10x128xf32>
    %39 = vector.extract_strided_slice %38 {offsets = [1, 0], sizes = [8, 128], strides = [1, 1]} : vector<10x128xf32> to vector<8x128xf32>
    %c0_21 = arith.constant 0 : index
    %c0_22 = arith.constant 0 : index
    %40 = vector.load %arg8[%c0_21, %c0_22] : memref<2x128xf32, #tpu.memory_space<vmem>>, vector<1x128xf32>
    %41 = vector.broadcast %40 : vector<1x128xf32> to vector<8x128xf32>
    %42 = arith.mulf %39, %41 : vector<8x128xf32>
    %c1_23 = arith.constant 1 : index
    %c0_24 = arith.constant 0 : index
    %43 = vector.load %arg8[%c1_23, %c0_24] : memref<2x128xf32, #tpu.memory_space<vmem>>, vector<1x128xf32>
    %44 = vector.broadcast %43 : vector<1x128xf32> to vector<8x128xf32>
    %45 = arith.addf %42, %44 : vector<8x128xf32>
    %46 = arith.addf %36, %45 : vector<8x128xf32>
    %cst_25 = arith.constant 0.000000e+00 : f32
    %47 = vector.broadcast %cst_25 : f32 to vector<8x128xf32>
    %48 = arith.maximumf %46, %47 : vector<8x128xf32>
    %c0_26 = arith.constant 0 : index
    %c0_27 = arith.constant 0 : index
    %c0_28 = arith.constant 0 : index
    %49 = vector.load %arg9[%c0_26, %c0_27, %c0_28] : memref<1x8x128xf32, #tpu.memory_space<vmem>>, vector<1x8x128xf32>
    %50 = vector.shape_cast %49 : vector<1x8x128xf32> to vector<8x128xf32>
    %51 = vector.shape_cast %48 : vector<8x128xf32> to vector<1x8x128xf32>
    tpu.vector_store %arg9[%c0_26, %c0_27, %c0_28], %51 {strides = array<i32>} : memref<1x8x128xf32, #tpu.memory_space<vmem>>, vector<1x8x128xf32>,
    return
  }
  func.func @transform_0(%arg0: i32, %arg1: i32) -> (i32, i32, i32, i32) {
    %c0_i32 = arith.constant 0 : i32
    %c0_i32_0 = arith.constant 0 : i32
    %c0_i32_1 = arith.constant 0 : i32
    return %arg0, %arg1, %c0_i32, %c0_i32_0 : i32, i32, i32, i32
  }
  func.func @transform_1(%arg0: i32, %arg1: i32) -> (i32, i32) {
    %c0_i32 = arith.constant 0 : i32
    %c0_i32_0 = arith.constant 0 : i32
    %c0_i32_1 = arith.constant 0 : i32
    return %c0_i32, %c0_i32_0 : i32, i32
  }
  func.func @transform_2(%arg0: i32, %arg1: i32) -> (i32, i32) {
    %c0_i32 = arith.constant 0 : i32
    %c0_i32_0 = arith.constant 0 : i32
    %c0_i32_1 = arith.constant 0 : i32
    return %c0_i32, %c0_i32_0 : i32, i32
  }
  func.func @transform_3(%arg0: i32, %arg1: i32) -> (i32, i32) {
    %c0_i32 = arith.constant 0 : i32
    %c0_i32_0 = arith.constant 0 : i32
    %c0_i32_1 = arith.constant 0 : i32
    return %c0_i32, %c0_i32_0 : i32, i32
  }
  func.func @transform_4(%arg0: i32, %arg1: i32) -> (i32, i32) {
    %c0_i32 = arith.constant 0 : i32
    %c0_i32_0 = arith.constant 0 : i32
    %c0_i32_1 = arith.constant 0 : i32
    return %c0_i32, %c0_i32_0 : i32, i32
  }
  func.func @transform_5(%arg0: i32, %arg1: i32) -> (i32, i32) {
    %c0_i32 = arith.constant 0 : i32
    %c0_i32_0 = arith.constant 0 : i32
    %c0_i32_1 = arith.constant 0 : i32
    return %c0_i32, %c0_i32_0 : i32, i32
  }
  func.func @transform_6(%arg0: i32, %arg1: i32) -> (i32, i32) {
    %c0_i32 = arith.constant 0 : i32
    %c0_i32_0 = arith.constant 0 : i32
    %c0_i32_1 = arith.constant 0 : i32
    return %c0_i32, %c0_i32_0 : i32, i32
  }
  func.func @transform_7(%arg0: i32, %arg1: i32) -> (i32, i32, i32) {
    %c0_i32 = arith.constant 0 : i32
    %c0_i32_0 = arith.constant 0 : i32
    return %arg0, %arg1, %c0_i32 : i32, i32, i32
  }
}

</mosaic_0001>

<llo_original>
// kernel: basic_block_forward.1
$region0: #{basic_block_forward.1}
  #allocation0 [shape = 'u32[]', space=smem, size = 0x4, offset = 0x4, fixed_abs, tag = 'smem constant byte address 0x4 - core index']
  #allocation1 [shape = 'u32[144,128]{1,0:T(1,128)}', space=vmem, size = 0x12000, scoped, tag = 'internal scratch']
  %s0 = inlined_call_operand.vmem [shape: bf16[2,1,10,12], index: 0, kind: input, shape index: {}]
  %s1 = inlined_call_operand.vmem [shape: bf16[12,128], index: 1, kind: input, shape index: {}]
  %s2 = inlined_call_operand.vmem [shape: bf16[12,128], index: 2, kind: input, shape index: {}]
  %s3 = inlined_call_operand.vmem [shape: bf16[384,128], index: 3, kind: input, shape index: {}]
  %s4 = inlined_call_operand.vmem [shape: f32[2,128], index: 4, kind: input, shape index: {}]
  %s5 = inlined_call_operand.vmem [shape: f32[2,128], index: 5, kind: input, shape index: {}]
  %s6 = inlined_call_operand.vmem [shape: f32[2,128], index: 6, kind: input, shape index: {}]
  %s7 = inlined_call_operand.vmem [shape: f32[2,8,128], index: 7, kind: output, shape index: {}]
  %s8 = sld [smem:[#allocation0]]
  $region61: #{basic_block_forward.1} parent=0
    _
  %s10 = ssub.s32 1, %s8
  %s11 = scalar_select 0, %s10, %s8
  loop: start=0, step=1, limit=4
  $region2: #{basic_block_forward.1} parent=0 // loop_pre_header
    _
  $region3: #{basic_block_forward.1} parent=0 // loop_header
    %s13 = sphi 0, %s17
    %p14 = scmp.ge.s32.totalorder %s13, 4
    %s20 = sphi 0, %s32
    %s21 = sphi 0, %s28
    %s22 = sphi 0, %s20
    %s23 = sphi 0, %s21
    %s24 = sphi 0, %s22
    %s25 = sphi 0, %s23
    %s37 = sphi 0, %s39
    %s40 = sphi 0, %s37
    %s41 = sphi 0, %s40
    %s57 = sphi 0, %s41
    %s61 = sphi 0, %s61
    %s63 = sphi 0, %s61
    %s64 = sphi 0, %s63
    %s78 = sphi 0, %s64
    %s82 = sphi 0, %s82
    %s84 = sphi 0, %s82
    %s85 = sphi 0, %s84
    %s99 = sphi 0, %s85
    %s103 = sphi 0, %s103
    %s105 = sphi 0, %s103
    %s106 = sphi 0, %s105
    %s120 = sphi 0, %s106
    %s124 = sphi 0, %s124
    %s126 = sphi 0, %s124
    %s127 = sphi 0, %s126
    %s141 = sphi 0, %s127
    %s145 = sphi 0, %s145
    %s147 = sphi 0, %s145
    %s148 = sphi 0, %s147
    %s162 = sphi 0, %s148
    %s166 = sphi 0, %s166
    %s168 = sphi 0, %s166
    %s169 = sphi 0, %s168
    %s183 = sphi 0, %s169
    %s191 = sphi 0, %s193
    %s194 = sphi 0, %s191
    %s195 = sphi 0, %s194
    %s211 = sphi 0, %s195
  $region4: #{basic_block_forward.1} parent=0 // loop_header_branch
    %16 = sbr.rel (%p14) target = $region8
  $region5: #{basic_block_forward.1} parent=0 // loop_body
    %s18 = ssub.s32 %s13, 1
    %s19 = ssub.s32 %s13, 2
    %s26 = sadd.s32 1, %s21
    %p27 = scmp.ge.s32.totalorder %s26, 1
    %s28 = scalar_select %p27, 0, %s26
    %s29 = sadd.s32 1, %s20
    %s30 = scalar_select %p27, %s29, %s20
    %p31 = scmp.ge.s32.totalorder %s30, 2
    %s32 = scalar_select %p31, 0, %s30
    %s33 = ssub.s32 %s20, %s32
    %s34 = ssub.s32 %s21, %s28
    %s35 = sor.u32 %s33, %s34
    %p36 = scmp.eq.s32.totalorder %s35, 0
    %s38 = sadd.s32 %s37, 1
    %s39 = scalar_select %p36, %s37, %s38
    %p42 = pneg %p36
    %p43 = scmp.eq.s32.totalorder %s13, 1
    %p44 = por %p42, %p43
    %p45 = scmp.ne.s32.totalorder %s37, %s40
    %p46 = scmp.eq.s32.totalorder %s13, 0
    %p47 = por %p45, %p46
    %p48 = scmp.ne.s32.totalorder %s37, %s40
    %p49 = scmp.eq.s32.totalorder %s18, 1
    %p50 = por %p48, %p49
    %p51 = scmp.ne.s32.totalorder %s40, %s41
    %p52 = scmp.eq.s32.totalorder %s18, 0
    %p53 = por %p51, %p52
    %p54 = scmp.ne.s32.totalorder %s40, %s41
    %p55 = scmp.eq.s32.totalorder %s19, 1
    %p56 = por %p54, %p55
    %p58 = scmp.ne.s32.totalorder %s41, %s57
    %p59 = scmp.eq.s32.totalorder %s19, 0
    %p60 = por %p58, %p59
    %s62 = sadd.s32 %s61, 1
    %p65 = scmp.eq.s32.totalorder %s13, 1
    %p66 = scmp.ne.s32.totalorder %s61, %s63
    %p67 = scmp.eq.s32.totalorder %s13, 0
    %p68 = por %p66, %p67
    %p69 = scmp.ne.s32.totalorder %s61, %s63
    %p70 = scmp.eq.s32.totalorder %s18, 1
    %p71 = por %p69, %p70
    %p72 = scmp.ne.s32.totalorder %s63, %s64
    %p73 = scmp.eq.s32.totalorder %s18, 0
    %p74 = por %p72, %p73
    %p75 = scmp.ne.s32.totalorder %s63, %s64
    %p76 = scmp.eq.s32.totalorder %s19, 1
    %p77 = por %p75, %p76
    %p79 = scmp.ne.s32.totalorder %s64, %s78
    %p80 = scmp.eq.s32.totalorder %s19, 0
    %p81 = por %p79, %p80
    %s83 = sadd.s32 %s82, 1
    %p86 = scmp.eq.s32.totalorder %s13, 1
    %p87 = scmp.ne.s32.totalorder %s82, %s84
    %p88 = scmp.eq.s32.totalorder %s13, 0
    %p89 = por %p87, %p88
    %p90 = scmp.ne.s32.totalorder %s82, %s84
    %p91 = scmp.eq.s32.totalorder %s18, 1
    %p92 = por %p90, %p91
    %p93 = scmp.ne.s32.totalorder %s84, %s85
    %p94 = scmp.eq.s32.totalorder %s18, 0
    %p95 = por %p93, %p94
    %p96 = scmp.ne.s32.totalorder %s84, %s85
    %p97 = scmp.eq.s32.totalorder %s19, 1
    %p98 = por %p96, %p97
    %p100 = scmp.ne.s32.totalorder %s85, %s99
    %p101 = scmp.eq.s32.totalorder %s19, 0
    %p102 = por %p100, %p101
    %s104 = sadd.s32 %s103, 1
    %p107 = scmp.eq.s32.totalorder %s13, 1
    %p108 = scmp.ne.s32.totalorder %s103, %s105
    %p109 = scmp.eq.s32.totalorder %s13, 0
    %p110 = por %p108, %p109
    %p111 = scmp.ne.s32.totalorder %s103, %s105
    %p112 = scmp.eq.s32.totalorder %s18, 1
    %p113 = por %p111, %p112
    %p114 = scmp.ne.s32.totalorder %s105, %s106
    %p115 = scmp.eq.s32.totalorder %s18, 0
    %p116 = por %p114, %p115
    %p117 = scmp.ne.s32.totalorder %s105, %s106
    %p118 = scmp.eq.s32.totalorder %s19, 1
    %p119 = por %p117, %p118
    %p121 = scmp.ne.s32.totalorder %s106, %s120
    %p122 = scmp.eq.s32.totalorder %s19, 0
    %p123 = por %p121, %p122
    %s125 = sadd.s32 %s124, 1
    %p128 = scmp.eq.s32.totalorder %s13, 1
    %p129 = scmp.ne.s32.totalorder %s124, %s126
    %p130 = scmp.eq.s32.totalorder %s13, 0
    %p131 = por %p129, %p130
    %p132 = scmp.ne.s32.totalorder %s124, %s126
    %p133 = scmp.eq.s32.totalorder %s18, 1
    %p134 = por %p132, %p133
    %p135 = scmp.ne.s32.totalorder %s126, %s127
    %p136 = scmp.eq.s32.totalorder %s18, 0
    %p137 = por %p135, %p136
    %p138 = scmp.ne.s32.totalorder %s126, %s127
    %p139 = scmp.eq.s32.totalorder %s19, 1
    %p140 = por %p138, %p139
    %p142 = scmp.ne.s32.totalorder %s127, %s141
    %p143 = scmp.eq.s32.totalorder %s19, 0
    %p144 = por %p142, %p143
    %s146 = sadd.s32 %s145, 1
    %p149 = scmp.eq.s32.totalorder %s13, 1
    %p150 = scmp.ne.s32.totalorder %s145, %s147
    %p151 = scmp.eq.s32.totalorder %s13, 0
    %p152 = por %p150, %p151
    %p153 = scmp.ne.s32.totalorder %s145, %s147
    %p154 = scmp.eq.s32.totalorder %s18, 1
    %p155 = por %p153, %p154
    %p156 = scmp.ne.s32.totalorder %s147, %s148
    %p157 = scmp.eq.s32.totalorder %s18, 0
    %p158 = por %p156, %p157
    %p159 = scmp.ne.s32.totalorder %s147, %s148
    %p160 = scmp.eq.s32.totalorder %s19, 1
    %p161 = por %p159, %p160
    %p163 = scmp.ne.s32.totalorder %s148, %s162
    %p164 = scmp.eq.s32.totalorder %s19, 0
    %p165 = por %p163, %p164
    %s167 = sadd.s32 %s166, 1
    %p170 = scmp.eq.s32.totalorder %s13, 1
    %p171 = scmp.ne.s32.totalorder %s166, %s168
    %p172 = scmp.eq.s32.totalorder %s13, 0
    %p173 = por %p171, %p172
    %p174 = scmp.ne.s32.totalorder %s166, %s168
    %p175 = scmp.eq.s32.totalorder %s18, 1
    %p176 = por %p174, %p175
    %p177 = scmp.ne.s32.totalorder %s168, %s169
    %p178 = scmp.eq.s32.totalorder %s18, 0
    %p179 = por %p177, %p178
    %p180 = scmp.ne.s32.totalorder %s168, %s169
    %p181 = scmp.eq.s32.totalorder %s19, 1
    %p182 = por %p180, %p181
    %p184 = scmp.ne.s32.totalorder %s169, %s183
    %p185 = scmp.eq.s32.totalorder %s19, 0
    %p186 = por %p184, %p185
    %s187 = ssub.s32 %s20, %s32
    %s188 = ssub.s32 %s21, %s28
    %s189 = sor.u32 %s187, %s188
    %p190 = scmp.eq.s32.totalorder %s189, 0
    %s192 = sadd.s32 %s191, 1
    %s193 = scalar_select %p190, %s191, %s192
    %p196 = pneg %p190
    %p197 = scmp.eq.s32.totalorder %s13, 1
    %p198 = por %p196, %p197
    %p199 = scmp.ne.s32.totalorder %s191, %s194
    %p200 = scmp.eq.s32.totalorder %s13, 0
    %p201 = por %p199, %p200
    %p202 = scmp.ne.s32.totalorder %s191, %s194
    %p203 = scmp.eq.s32.totalorder %s18, 1
    %p204 = por %p202, %p203
    %p205 = scmp.ne.s32.totalorder %s194, %s195
    %p206 = scmp.eq.s32.totalorder %s18, 0
    %p207 = por %p205, %p206
    %p208 = scmp.ne.s32.totalorder %s194, %s195
    %p209 = scmp.eq.s32.totalorder %s19, 1
    %p210 = por %p208, %p209
    %p212 = scmp.ne.s32.totalorder %s195, %s211
    %p213 = scmp.eq.s32.totalorder %s19, 0
    %p214 = por %p212, %p213
    %p215 = scmp.le.s32.totalorder 1, %s13
    %p216 = scmp.lt.s32.totalorder %s13, 3
    %p217 = pnand %p215, %p216
    %p218 = pneg %p217
    // Predicated region
    $region9: #{basic_block_forward.1} parent=5 // pred_check
      _
    $region10: #{basic_block_forward.1} parent=5 // pred_check_branch
      %220 = sbr.rel (%p217) target = $region12
    $region11: #{basic_block_forward.1} parent=5 // pred_region
      %s221 = ssub.s32 %s13, 1
      // Predicated region
      $region13: #{basic_block_forward.1} parent=11 // pred_check
        %p222 = pneg %p74
      $region14: #{basic_block_forward.1} parent=11 // pred_check_branch
        %224 = sbr.rel (%p222) target = $region16
      $region15: #{basic_block_forward.1} parent=11 // pred_region
        _
      $region16: #{basic_block_forward.1} parent=11 // pred_fallthru
        _
      // Predicated region
      $region17: #{basic_block_forward.1} parent=11 // pred_check
        %p225 = pneg %p95
      $region18: #{basic_block_forward.1} parent=11 // pred_check_branch
        %227 = sbr.rel (%p225) target = $region20
      $region19: #{basic_block_forward.1} parent=11 // pred_region
        _
      $region20: #{basic_block_forward.1} parent=11 // pred_fallthru
        _
      // Predicated region
      $region21: #{basic_block_forward.1} parent=11 // pred_check
        %p228 = pneg %p116
      $region22: #{basic_block_forward.1} parent=11 // pred_check_branch
        %230 = sbr.rel (%p228) target = $region24
      $region23: #{basic_block_forward.1} parent=11 // pred_region
        _
      $region24: #{basic_block_forward.1} parent=11 // pred_fallthru
        _
      // Predicated region
      $region25: #{basic_block_forward.1} parent=11 // pred_check
        %p231 = pneg %p137
      $region26: #{basic_block_forward.1} parent=11 // pred_check_branch
        %233 = sbr.rel (%p231) target = $region28
      $region27: #{basic_block_forward.1} parent=11 // pred_region
        _
      $region28: #{basic_block_forward.1} parent=11 // pred_fallthru
        _
      // Predicated region
      $region29: #{basic_block_forward.1} parent=11 // pred_check
        %p234 = pneg %p158
      $region30: #{basic_block_forward.1} parent=11 // pred_check_branch
        %236 = sbr.rel (%p234) target = $region32
      $region31: #{basic_block_forward.1} parent=11 // pred_region
        _
      $region32: #{basic_block_forward.1} parent=11 // pred_fallthru
        _
      // Predicated region
      $region33: #{basic_block_forward.1} parent=11 // pred_check
        %p237 = pneg %p179
      $region34: #{basic_block_forward.1} parent=11 // pred_check_branch
        %239 = sbr.rel (%p237) target = $region36
      $region35: #{basic_block_forward.1} parent=11 // pred_region
        _
      $region36: #{basic_block_forward.1} parent=11 // pred_fallthru
        _
    $region12: #{basic_block_forward.1} parent=5 // pred_fallthru
      _
    %p240 = scmp.lt.s32.totalorder %s13, 2
    // Predicated region
    $region37: #{basic_block_forward.1} parent=5 // pred_check
      %p241 = pneg %p240
    $region38: #{basic_block_forward.1} parent=5 // pred_check_branch
      %243 = sbr.rel (%p241) target = $region40
    $region39: #{basic_block_forward.1} parent=5 // pred_region
      // Predicated region
      $region41: #{basic_block_forward.1} parent=39 // pred_check
        %p244 = pneg %p47
      $region42: #{basic_block_forward.1} parent=39 // pred_check_branch
        %246 = sbr.rel (%p244) target = $region44
      $region43: #{basic_block_forward.1} parent=39 // pred_region
        %p247 = scmp.lt.s32.totalorder %s20, 1
        %s248 = scalar_select %p247, %s20, 1
        %p249 = scmp.lt.s32.totalorder %s21, 0
        %s250 = scalar_select %p249, %s21, 0
        %s251 = smul.addr %s250, 2
        %s252 = smul.addr %s248, 2
        %s253 = sadd.s32 %s251, %s252
        %s254 = smul.addr %s253, 4
        %s255 = scalar_lea.vmem %s0, %s254
      $region44: #{basic_block_forward.1} parent=39 // pred_fallthru
        _
    $region40: #{basic_block_forward.1} parent=5 // pred_fallthru
      _
    %p256 = scmp.le.s32.totalorder 1, %s13
    %p257 = scmp.lt.s32.totalorder %s13, 3
    %p258 = pnand %p256, %p257
    %p259 = pneg %p258
    // Predicated region
    $region45: #{basic_block_forward.1} parent=5 // pred_check
      _
    $region46: #{basic_block_forward.1} parent=5 // pred_check_branch
      %261 = sbr.rel (%p258) target = $region48
    $region47: #{basic_block_forward.1} parent=5 // pred_region
      %s262 = ssub.s32 %s13, 1
      %p263 = scmp.lt.s32.totalorder %s22, 1
      %s264 = scalar_select %p263, %s22, 1
      %p265 = scmp.lt.s32.totalorder %s23, 0
      %s266 = scalar_select %p265, %s23, 0
      %s267 = smul.addr %s266, 2
      %s268 = smul.addr %s264, 2
      %s269 = sadd.s32 %s267, %s268
      %s270 = smul.addr %s269, 4
      %s271 = scalar_lea.vmem %s0, %s270
      %p272 = pneg %p53
      %p273 = pneg %p50
      %p274 = pneg %p74
      %p275 = pneg %p71
      %p276 = pneg %p95
      %p277 = pneg %p92
      %p278 = pneg %p116
      %p279 = pneg %p113
      %p280 = pneg %p137
      %p281 = pneg %p134
      %p282 = pneg %p158
      %p283 = pneg %p155
      %p284 = pneg %p179
      %p285 = pneg %p176
      %p286 = pneg %p207
      %p287 = pneg %p204
      %p288 = scmp.lt.s32.totalorder %s22, 1
      %s289 = scalar_select %p288, %s22, 1
      %p290 = scmp.lt.s32.totalorder %s23, 0
      %s291 = scalar_select %p290, %s23, 0
      %s292 = sadd.s32 %s291, %s289
      %s293 = smul.addr %s292, 8
      %s294 = scalar_lea.vmem %s7, %s293
      %p295 = scmp.lt.s32.totalorder %s22, 1
      %s296 = scalar_select %p295, %s22, 1
      %p297 = scmp.lt.s32.totalorder %s23, 0
      %s298 = scalar_select %p297, %s23, 0
      %s299 = smul.addr %s298, 2
      %s300 = smul.addr %s296, 2
      %s301 = sadd.s32 %s299, %s300
      %s302 = smul.addr %s301, 4
      %s303 = scalar_lea.vmem %s0, %s302
      %p304 = scmp.lt.s32.totalorder %s22, 1
      %s305 = scalar_select %p304, %s22, 1
      %p306 = scmp.lt.s32.totalorder %s23, 0
      %s307 = scalar_select %p306, %s23, 0
      %s308 = sadd.s32 %s307, %s305
      %s309 = smul.addr %s308, 8
      %s310 = scalar_lea.vmem %s7, %s309
      %s312 = smul.u32 %s23, 8
      %v313 = vld [vmem:[%s303] sm:$0xf]
      %v314 = vld [vmem:[%s303 + $0x4] sm:$0x1]
      %v315 = vld [vmem:[%s1] sm:$0xf]
      %v316 = vld [vmem:[%s1 + $0x4] sm:$0x3]
      %v319 = vunpack.c.l.b16 %v313
      %v320 = vunpack.c.l.b16 %v314
      %v321 = vpack.c.b16 %v320, %v319
      %v324 = vunpack.c.l.b16 %v315
      %v325 = vunpack.c.l.b16 %v316
      %v326 = vpack.c.b16 %v325, %v324
      %vm327 = vcmask 97280
      %v329 = vsel %vm327, %v321, 0
      %vm331 = vcmask 1045504
      %v333 = vsel %vm331, %v326, 0
      %335 = vmatprep.subr.bf16.mxu0 0
      %336 = vmatpush1.bf16.msra.mxu0 %v333
      %337 = vmatprep.subr.bf16.mxu0 0
      %338 = vmatpush1.bf16.msra.mxu0 0
      %339 = vmatprep.subr.bf16.mxu0 0
      %340 = vmatpush1.bf16.msra.mxu0 0
      %341 = vmatprep.subr.bf16.mxu0 0
      %342 = vmatpush1.bf16.msra.mxu0 0
      %343 = vmatprep.subr.bf16.mxu0 0
      %344 = vmatpush1.bf16.msra.mxu0 0
      %345 = vmatprep.subr.bf16.mxu0 0
      %346 = vmatpush1.bf16.msra.mxu0 0
      %347 = vmatprep.subr.bf16.mxu0 0
      %348 = vmatpush1.bf16.msra.mxu0 0
      %349 = vmatprep.subr.bf16.mxu0 0
      %350 = vmatpush1.bf16.msra.mxu0 0
      %351 = vmatprep.subr.bf16.mxu0 0
      %352 = vmatpush1.bf16.msra.mxu0 0
      %353 = vmatprep.subr.bf16.mxu0 0
      %354 = vmatpush1.bf16.msra.mxu0 0
      %355 = vmatprep.subr.bf16.mxu0 0
      %356 = vmatpush1.bf16.msra.mxu0 0
      %357 = vmatprep.subr.bf16.mxu0 0
      %358 = vmatpush1.bf16.msra.mxu0 0
      %359 = vmatprep.subr.bf16.mxu0 0
      %360 = vmatpush1.bf16.msra.mxu0 0
      %361 = vmatprep.subr.bf16.mxu0 0
      %362 = vmatpush1.bf16.msra.mxu0 0
      %363 = vmatprep.subr.bf16.mxu0 0
      %364 = vmatpush1.bf16.msra.mxu0 0
      %365 = vmatprep.subr.bf16.mxu0 0
      %366 = vmatpush1.bf16.msra.mxu0 0
      %367 = vmatprep.mubr.bf16.mxu0 0
      %368 = vmatmul.mubr.bf16.gmra.mrb[0].mxu0 %v329
      %v369 = vpop.f32.mrb[0].mxu0
      %v370 = vadd.f32 0.0, %v369
      %v371 = vpop.f32.mrb[0].mxu0
      %v372 = vpop.f32.mrb[0].mxu0
      %v373 = vadd.f32 0.0, %v372
      %v374 = vpop.f32.mrb[0].mxu0
      %375 = vdwg.mxu0
      %v376 = vld [vmem:[%s4] sm:$0x1]
      %v377 = vlaneseq
      %v378 = vshrl.u32 %v377, 7
      %v379 = vsub.s32 0, %v378
      %v380 = vrot.slane %v376, %v379
      %v381 = vmul.f32 %v370, %v380
      %v382 = vmul.f32 %v373, %v380
      %v383 = vld [vmem:[%s4 + $0x1] sm:$0x1]
      %v384 = vlaneseq
      %v385 = vshrl.u32 %v384, 7
      %v386 = vsub.s32 0, %v385
      %v387 = vrot.slane %v383, %v386
      %v388 = vadd.f32 %v381, %v387
      %v389 = vadd.f32 %v382, %v387
      %v390 = vmax.f32 %v388, 0.0
      %v391 = vmax.f32 %v389, 0.0
      %s392 = ssub.s32 %s312, 1
      %v393 = vlaneseq
      %v394 = vshrl.u32 %v393, 7
      %v395 = vadd.s32 %v394, 8
      %v396 = vstv %s392
      %v397 = vadd.s32 %v396, %v394
      %v398 = vadd.s32 %v396, %v395
      %vm399 = vcmp.ge.s32.totalorder %v397, 0
      %vm400 = vcmp.ge.s32.totalorder %v398, 0
      %vm401 = vcmp.lt.s32.totalorder %v397, 8
      %vm402 = vcmp.lt.s32.totalorder %v398, 8
      %vm403 = vmand %vm399, %vm401
      %vm404 = vmand %vm400, %vm402
      %v405 = vsel %vm403, %v390, 0.0
      %v406 = vsel %vm404, %v391, 0.0
      %vm409 = vcmask 1046528
      %v410 = vrot.slane %v405, 1
      %v411 = vrot.slane %v406, 1
      %v412 = vsel %vm409, %v410, %v411
      %v414 = vrot.slane %v405, 2
      %v415 = vrot.slane %v406, 2
      %v416 = vsel %vm331, %v414, %v415
      %v418 = vpack.c.bf16 %v405, %v405
      %v419 = vpack.c.bf16 %v412, %v412
      %v420 = vpack.c.bf16 %v416, %v416
      %v421 = vld [vmem:[%s3] sm:$0xf]
      %v422 = vld [vmem:[%s3 + $0x4] sm:$0xf]
      %v423 = vld [vmem:[%s3 + $0x8] sm:$0xf]
      %v424 = vld [vmem:[%s3 + $0xc] sm:$0xf]
      %v425 = vld [vmem:[%s3 + $0x10] sm:$0xf]
      %v426 = vld [vmem:[%s3 + $0x14] sm:$0xf]
      %v427 = vld [vmem:[%s3 + $0x18] sm:$0xf]
      %v428 = vld [vmem:[%s3 + $0x1c] sm:$0xf]
      %v429 = vld [vmem:[%s3 + $0x20] sm:$0xf]
      %v430 = vld [vmem:[%s3 + $0x24] sm:$0xf]
      %v431 = vld [vmem:[%s3 + $0x28] sm:$0xf]
      %v432 = vld [vmem:[%s3 + $0x2c] sm:$0xf]
      %v433 = vld [vmem:[%s3 + $0x30] sm:$0xf]
      %v434 = vld [vmem:[%s3 + $0x34] sm:$0xf]
      %v435 = vld [vmem:[%s3 + $0x38] sm:$0xf]
      %v436 = vld [vmem:[%s3 + $0x3c] sm:$0xf]
      %v437 = vld [vmem:[%s3 + $0x40] sm:$0xf]
      %v438 = vld [vmem:[%s3 + $0x44] sm:$0xf]
      %v439 = vld [vmem:[%s3 + $0x48] sm:$0xf]
      %v440 = vld [vmem:[%s3 + $0x4c] sm:$0xf]
      %v441 = vld [vmem:[%s3 + $0x50] sm:$0xf]
      %v442 = vld [vmem:[%s3 + $0x54] sm:$0xf]
      %v443 = vld [vmem:[%s3 + $0x58] sm:$0xf]
      %v444 = vld [vmem:[%s3 + $0x5c] sm:$0xf]
      %v445 = vld [vmem:[%s3 + $0x60] sm:$0xf]
      %v446 = vld [vmem:[%s3 + $0x64] sm:$0xf]
      %v447 = vld [vmem:[%s3 + $0x68] sm:$0xf]
      %v448 = vld [vmem:[%s3 + $0x6c] sm:$0xf]
      %v449 = vld [vmem:[%s3 + $0x70] sm:$0xf]
      %v450 = vld [vmem:[%s3 + $0x74] sm:$0xf]
      %v451 = vld [vmem:[%s3 + $0x78] sm:$0xf]
      %v452 = vld [vmem:[%s3 + $0x7c] sm:$0xf]
      %v453 = vld [vmem:[%s3 + $0x80] sm:$0xf]
      %v454 = vld [vmem:[%s3 + $0x84] sm:$0xf]
      %v455 = vld [vmem:[%s3 + $0x88] sm:$0xf]
      %v456 = vld [vmem:[%s3 + $0x8c] sm:$0xf]
      %v457 = vld [vmem:[%s3 + $0x90] sm:$0xf]
      %v458 = vld [vmem:[%s3 + $0x94] sm:$0xf]
      %v459 = vld [vmem:[%s3 + $0x98] sm:$0xf]
      %v460 = vld [vmem:[%s3 + $0x9c] sm:$0xf]
      %v461 = vld [vmem:[%s3 + $0xa0] sm:$0xf]
      %v462 = vld [vmem:[%s3 + $0xa4] sm:$0xf]
      %v463 = vld [vmem:[%s3 + $0xa8] sm:$0xf]
      %v464 = vld [vmem:[%s3 + $0xac] sm:$0xf]
      %v465 = vld [vmem:[%s3 + $0xb0] sm:$0xf]
      %v466 = vld [vmem:[%s3 + $0xb4] sm:$0xf]
      %v467 = vld [vmem:[%s3 + $0xb8] sm:$0xf]
      %v468 = vld [vmem:[%s3 + $0xbc] sm:$0xf]
      %v517 = vunpack.c.l.b16 %v421
      %v518 = vunpack.c.l.b16 %v422
      %v519 = vunpack.c.l.b16 %v423
      %v520 = vunpack.c.l.b16 %v424
      %v521 = vunpack.c.l.b16 %v425
      %v522 = vunpack.c.l.b16 %v426
      %v523 = vunpack.c.l.b16 %v427
      %v524 = vunpack.c.l.b16 %v428
      %v525 = vunpack.c.l.b16 %v429
      %v526 = vunpack.c.l.b16 %v430
      %v527 = vunpack.c.l.b16 %v431
      %v528 = vunpack.c.l.b16 %v432
      %v529 = vunpack.c.l.b16 %v433
      %v530 = vunpack.c.l.b16 %v434
      %v531 = vunpack.c.l.b16 %v435
      %v532 = vunpack.c.l.b16 %v436
      %v533 = vunpack.c.l.b16 %v437
      %v534 = vunpack.c.l.b16 %v438
      %v535 = vunpack.c.l.b16 %v439
      %v536 = vunpack.c.l.b16 %v440
      %v537 = vunpack.c.l.b16 %v441
      %v538 = vunpack.c.l.b16 %v442
      %v539 = vunpack.c.l.b16 %v443
      %v540 = vunpack.c.l.b16 %v444
      %v541 = vunpack.c.l.b16 %v445
      %v542 = vunpack.c.l.b16 %v446
      %v543 = vunpack.c.l.b16 %v447
      %v544 = vunpack.c.l.b16 %v448
      %v545 = vunpack.c.l.b16 %v449
      %v546 = vunpack.c.l.b16 %v450
      %v547 = vunpack.c.l.b16 %v451
      %v548 = vunpack.c.l.b16 %v452
      %v549 = vunpack.c.l.b16 %v453
      %v550 = vunpack.c.l.b16 %v454
      %v551 = vunpack.c.l.b16 %v455
      %v552 = vunpack.c.l.b16 %v456
      %v553 = vunpack.c.l.b16 %v457
      %v554 = vunpack.c.l.b16 %v458
      %v555 = vunpack.c.l.b16 %v459
      %v556 = vunpack.c.l.b16 %v460
      %v557 = vunpack.c.l.b16 %v461
      %v558 = vunpack.c.l.b16 %v462
      %v559 = vunpack.c.l.b16 %v463
      %v560 = vunpack.c.l.b16 %v464
      %v561 = vunpack.c.l.b16 %v465
      %v562 = vunpack.c.l.b16 %v466
      %v563 = vunpack.c.l.b16 %v467
      %v564 = vunpack.c.l.b16 %v468
      %v565 = vpack.c.b16 %v518, %v517
      %v566 = vpack.c.b16 %v520, %v519
      %v567 = vpack.c.b16 %v522, %v521
      %v568 = vpack.c.b16 %v524, %v523
      %v569 = vpack.c.b16 %v526, %v525
      %v570 = vpack.c.b16 %v528, %v527
      %v571 = vpack.c.b16 %v530, %v529
      %v572 = vpack.c.b16 %v532, %v531
      %v573 = vpack.c.b16 %v534, %v533
      %v574 = vpack.c.b16 %v536, %v535
      %v575 = vpack.c.b16 %v538, %v537
      %v576 = vpack.c.b16 %v540, %v539
      %v577 = vpack.c.b16 %v542, %v541
      %v578 = vpack.c.b16 %v544, %v543
      %v579 = vpack.c.b16 %v546, %v545
      %v580 = vpack.c.b16 %v548, %v547
      %v581 = vpack.c.b16 %v550, %v549
      %v582 = vpack.c.b16 %v552, %v551
      %v583 = vpack.c.b16 %v554, %v553
      %v584 = vpack.c.b16 %v556, %v555
      %v585 = vpack.c.b16 %v558, %v557
      %v586 = vpack.c.b16 %v560, %v559
      %v587 = vpack.c.b16 %v562, %v561
      %v588 = vpack.c.b16 %v564, %v563
      %613 = vmatprep.subr.bf16.mxu0 0
      %614 = vmatpush1.bf16.msra.mxu0 %v565
      %615 = vmatprep.subr.bf16.mxu0 0
      %616 = vmatpush1.bf16.msra.mxu0 %v566
      %617 = vmatprep.subr.bf16.mxu0 0
      %618 = vmatpush1.bf16.msra.mxu0 %v567
      %619 = vmatprep.subr.bf16.mxu0 0
      %620 = vmatpush1.bf16.msra.mxu0 %v568
      %621 = vmatprep.subr.bf16.mxu0 0
      %622 = vmatpush1.bf16.msra.mxu0 %v569
      %623 = vmatprep.subr.bf16.mxu0 0
      %624 = vmatpush1.bf16.msra.mxu0 %v570
      %625 = vmatprep.subr.bf16.mxu0 0
      %626 = vmatpush1.bf16.msra.mxu0 %v571
      %627 = vmatprep.subr.bf16.mxu0 0
      %628 = vmatpush1.bf16.msra.mxu0 %v572
      %629 = vmatprep.subr.bf16.mxu0 0
      %630 = vmatpush1.bf16.msra.mxu0 %v573
      %631 = vmatprep.subr.bf16.mxu0 0
      %632 = vmatpush1.bf16.msra.mxu0 %v574
      %633 = vmatprep.subr.bf16.mxu0 0
      %634 = vmatpush1.bf16.msra.mxu0 %v575
      %635 = vmatprep.subr.bf16.mxu0 0
      %636 = vmatpush1.bf16.msra.mxu0 %v576
      %637 = vmatprep.subr.bf16.mxu0 0
      %638 = vmatpush1.bf16.msra.mxu0 %v577
      %639 = vmatprep.subr.bf16.mxu0 0
      %640 = vmatpush1.bf16.msra.mxu0 %v578
      %641 = vmatprep.subr.bf16.mxu0 0
      %642 = vmatpush1.bf16.msra.mxu0 %v579
      %643 = vmatprep.subr.bf16.mxu0 0
      %644 = vmatpush1.bf16.msra.mxu0 %v580
      %645 = vmatprep.mubr.bf16.mxu0 %v419
      %646 = vmatmul.mubr.bf16.gmra.mrb[0].mxu0 %v418
      %v647 = vpop.f32.mrb[0].mxu0
      %v648 = vadd.f32 0.0, %v647
      %v649 = vpop.f32.mrb[0].mxu0
      %v650 = vpop.f32.mrb[0].mxu0
      %v651 = vpop.f32.mrb[0].mxu0
      %652 = vdwg.mxu0
      %653 = vmatprep.subr.bf16.mxu0 0
      %654 = vmatpush1.bf16.msra.mxu0 %v581
      %655 = vmatprep.subr.bf16.mxu0 0
      %656 = vmatpush1.bf16.msra.mxu0 %v582
      %657 = vmatprep.subr.bf16.mxu0 0
      %658 = vmatpush1.bf16.msra.mxu0 %v583
      %659 = vmatprep.subr.bf16.mxu0 0
      %660 = vmatpush1.bf16.msra.mxu0 %v584
      %661 = vmatprep.subr.bf16.mxu0 0
      %662 = vmatpush1.bf16.msra.mxu0 %v585
      %663 = vmatprep.subr.bf16.mxu0 0
      %664 = vmatpush1.bf16.msra.mxu0 %v586
      %665 = vmatprep.subr.bf16.mxu0 0
      %666 = vmatpush1.bf16.msra.mxu0 %v587
      %667 = vmatprep.subr.bf16.mxu0 0
      %668 = vmatpush1.bf16.msra.mxu0 %v588
      %669 = vmatprep.subr.bf16.mxu0 0
      %670 = vmatpush1.bf16.msra.mxu0 0
      %671 = vmatprep.subr.bf16.mxu0 0
      %672 = vmatpush1.bf16.msra.mxu0 0
      %673 = vmatprep.subr.bf16.mxu0 0
      %674 = vmatpush1.bf16.msra.mxu0 0
      %675 = vmatprep.subr.bf16.mxu0 0
      %676 = vmatpush1.bf16.msra.mxu0 0
      %677 = vmatprep.subr.bf16.mxu0 0
      %678 = vmatpush1.bf16.msra.mxu0 0
      %679 = vmatprep.subr.bf16.mxu0 0
      %680 = vmatpush1.bf16.msra.mxu0 0
      %681 = vmatprep.subr.bf16.mxu0 0
      %682 = vmatpush1.bf16.msra.mxu0 0
      %683 = vmatprep.subr.bf16.mxu0 0
      %684 = vmatpush1.bf16.msra.mxu0 0
      %685 = vmatprep.mubr.bf16.mxu0 0
      %686 = vmatmul.mubr.bf16.gmra.mrb[0].mxu0 %v420
      %v687 = vpop.f32.mrb[0].mxu0
      %v688 = vadd.f32 %v648, %v687
      %v689 = vpop.f32.mrb[0].mxu0
      %v690 = vpop.f32.mrb[0].mxu0
      %v691 = vpop.f32.mrb[0].mxu0
      %692 = vdwg.mxu0
      %v693 = vld [vmem:[%s5] sm:$0x1]
      %v694 = vlaneseq
      %v695 = vshrl.u32 %v694, 7
      %v696 = vsub.s32 0, %v695
      %v697 = vrot.slane %v693, %v696
      %v698 = vmul.f32 %v688, %v697
      %v699 = vld [vmem:[%s5 + $0x1] sm:$0x1]
      %v700 = vlaneseq
      %v701 = vshrl.u32 %v700, 7
      %v702 = vsub.s32 0, %v701
      %v703 = vrot.slane %v699, %v702
      %v704 = vadd.f32 %v698, %v703
      %v705 = vld [vmem:[%s2] sm:$0xf]
      %v706 = vld [vmem:[%s2 + $0x4] sm:$0x3]
      %v709 = vunpack.c.l.b16 %v705
      %v710 = vunpack.c.l.b16 %v706
      %v711 = vpack.c.b16 %v710, %v709
      %v713 = vsel %vm331, %v711, 0
      %715 = vmatprep.subr.bf16.mxu0 0
      %716 = vmatpush1.bf16.msra.mxu0 %v713
      %717 = vmatprep.subr.bf16.mxu0 0
      %718 = vmatpush1.bf16.msra.mxu0 0
      %719 = vmatprep.subr.bf16.mxu0 0
      %720 = vmatpush1.bf16.msra.mxu0 0
      %721 = vmatprep.subr.bf16.mxu0 0
      %722 = vmatpush1.bf16.msra.mxu0 0
      %723 = vmatprep.subr.bf16.mxu0 0
      %724 = vmatpush1.bf16.msra.mxu0 0
      %725 = vmatprep.subr.bf16.mxu0 0
      %726 = vmatpush1.bf16.msra.mxu0 0
      %727 = vmatprep.subr.bf16.mxu0 0
      %728 = vmatpush1.bf16.msra.mxu0 0
      %729 = vmatprep.subr.bf16.mxu0 0
      %730 = vmatpush1.bf16.msra.mxu0 0
      %731 = vmatprep.subr.bf16.mxu0 0
      %732 = vmatpush1.bf16.msra.mxu0 0
      %733 = vmatprep.subr.bf16.mxu0 0
      %734 = vmatpush1.bf16.msra.mxu0 0
      %735 = vmatprep.subr.bf16.mxu0 0
      %736 = vmatpush1.bf16.msra.mxu0 0
      %737 = vmatprep.subr.bf16.mxu0 0
      %738 = vmatpush1.bf16.msra.mxu0 0
      %739 = vmatprep.subr.bf16.mxu0 0
      %740 = vmatpush1.bf16.msra.mxu0 0
      %741 = vmatprep.subr.bf16.mxu0 0
      %742 = vmatpush1.bf16.msra.mxu0 0
      %743 = vmatprep.subr.bf16.mxu0 0
      %744 = vmatpush1.bf16.msra.mxu0 0
      %745 = vmatprep.subr.bf16.mxu0 0
      %746 = vmatpush1.bf16.msra.mxu0 0
      %747 = vmatprep.mubr.bf16.mxu0 0
      %748 = vmatmul.mubr.bf16.gmra.mrb[0].mxu0 %v329
      %v749 = vpop.f32.mrb[0].mxu0
      %v750 = vadd.f32 0.0, %v749
      %v751 = vpop.f32.mrb[0].mxu0
      %v752 = vpop.f32.mrb[0].mxu0
      %v753 = vadd.f32 0.0, %v752
      %v754 = vpop.f32.mrb[0].mxu0
      %755 = vdwg.mxu0
      %v756 = vld [vmem:[%s6] sm:$0x1]
      %v757 = vlaneseq
      %v758 = vshrl.u32 %v757, 7
      %v759 = vsub.s32 0, %v758
      %v760 = vrot.slane %v756, %v759
      %v761 = vmul.f32 %v750, %v760
      %v762 = vmul.f32 %v753, %v760
      %v763 = vld [vmem:[%s6 + $0x1] sm:$0x1]
      %v764 = vlaneseq
      %v765 = vshrl.u32 %v764, 7
      %v766 = vsub.s32 0, %v765
      %v767 = vrot.slane %v763, %v766
      %v768 = vadd.f32 %v761, %v767
      %v769 = vadd.f32 %v762, %v767
      %v772 = vrot.slane %v768, 1
      %v773 = vrot.slane %v769, 1
      %v774 = vsel %vm409, %v772, %v773
      %v776 = vadd.f32 %v704, %v774
      %v777 = vmax.f32 %v776, 0.0
      %778 = vst [vmem:[%s310] sm:$0xff] %v777
      %p779 = scmp.lt.s32.totalorder %s22, 1
      %s780 = scalar_select %p779, %s22, 1
      %p781 = scmp.lt.s32.totalorder %s23, 0
      %s782 = scalar_select %p781, %s23, 0
      %s783 = sadd.s32 %s782, %s780
      %s784 = smul.addr %s783, 8
      %s785 = scalar_lea.vmem %s7, %s784
      // Predicated region
      $region49: #{basic_block_forward.1} parent=47 // pred_check
        %p786 = pneg %p204
      $region50: #{basic_block_forward.1} parent=47 // pred_check_branch
        %788 = sbr.rel (%p786) target = $region52
      $region51: #{basic_block_forward.1} parent=47 // pred_region
        _
      $region52: #{basic_block_forward.1} parent=47 // pred_fallthru
        _
    $region48: #{basic_block_forward.1} parent=5 // pred_fallthru
      _
    %p789 = scmp.le.s32.totalorder 2, %s13
    // Predicated region
    $region53: #{basic_block_forward.1} parent=5 // pred_check
      %p790 = pneg %p789
    $region54: #{basic_block_forward.1} parent=5 // pred_check_branch
      %792 = sbr.rel (%p790) target = $region56
    $region55: #{basic_block_forward.1} parent=5 // pred_region
      %s793 = ssub.s32 %s13, 2
      // Predicated region
      $region57: #{basic_block_forward.1} parent=55 // pred_check
        %p794 = pneg %p210
      $region58: #{basic_block_forward.1} parent=55 // pred_check_branch
        %796 = sbr.rel (%p794) target = $region60
      $region59: #{basic_block_forward.1} parent=55 // pred_region
        %p797 = scmp.lt.s32.totalorder %s24, 1
        %s798 = scalar_select %p797, %s24, 1
        %p799 = scmp.lt.s32.totalorder %s25, 0
        %s800 = scalar_select %p799, %s25, 0
        %s801 = sadd.s32 %s800, %s798
        %s802 = smul.addr %s801, 8
        %s803 = scalar_lea.vmem %s7, %s802
      $region60: #{basic_block_forward.1} parent=55 // pred_fallthru
        _
    $region56: #{basic_block_forward.1} parent=5 // pred_fallthru
      _
  $region6: #{basic_block_forward.1} parent=0 // loop_footer
    %s17 = sadd.s32 1, %s13
  $region7: #{basic_block_forward.1} parent=0 // loop_footer_branch
    %12 = sbr.rel target = $region3
  $region8: #{basic_block_forward.1} parent=0 // loop_exit
    _

</llo_original>
